<compile_context>
chip_gen: v7x
topology: tpu7x:2x2x1
jax: 0.10.0
libtpu: 0.0.40
codegen_flags: <defaults>
</compile_context>

<pallas_src>
import jax
import jax.numpy as jnp
from jax.experimental import pallas as pl
from jax.experimental.pallas import tpu as pltpu

LANE = 128   # TPU lane width; feature dims are padded to multiples of this.
OUT_P = 128  # lane-dense width for the final (scalar) output column.


def _round_up(x, m):
    return ((x + m - 1) // m) * m


# ---------------------------------------------------------------------------
# Kernel
# ---------------------------------------------------------------------------
def mlp_d_kernel(x_ref,
                 w1_ref, b1_ref,
                 w2_ref, b2_ref,
                 w3_ref, b3_ref,
                 w4_ref, b4_ref,
                 o_ref, acc_ref):
    """Fused 4-layer MLP on one (tb, tk) batch/K tile.

    Grid = (batch tiles, K tiles of the first layer).  Layer-1 partial products
    accumulate into f32 VMEM scratch; layers 2-4 + sigmoid run once per batch
    tile on the last K step.  All matmuls are bf16 on the MXU with f32
    accumulation; bias adds / ReLUs / sigmoid are f32.
    """
    k = pl.program_id(1)

    @pl.when(k == 0)
    def _():
        acc_ref[...] = jnp.zeros(acc_ref.shape, acc_ref.dtype)

    # Layer 1 partial product for this K slice.
    acc_ref[...] += jnp.dot(x_ref[...], w1_ref[...],
                            preferred_element_type=jnp.float32)

    @pl.when(k == pl.num_programs(1) - 1)
    def _():
        h = jnp.maximum(acc_ref[...] + b1_ref[...], 0.0).astype(jnp.bfloat16)

        h = jnp.dot(h, w2_ref[...], preferred_element_type=jnp.float32) + b2_ref[...]
        h = jnp.maximum(h, 0.0).astype(jnp.bfloat16)

        h = jnp.dot(h, w3_ref[...], preferred_element_type=jnp.float32) + b3_ref[...]
        h = jnp.maximum(h, 0.0).astype(jnp.bfloat16)

        # Final layer is padded to 128 output lanes so the store is lane-dense
        # (only column 0 is the real logit; the rest is sliced off outside).
        logits = jnp.dot(h, w4_ref[...], preferred_element_type=jnp.float32) + b4_ref[...]
        o_ref[...] = jax.nn.sigmoid(logits).astype(o_ref.dtype)


# ---------------------------------------------------------------------------
# Tiling / VMEM budgeting
# ---------------------------------------------------------------------------
def _vmem_budget_bytes():
    """~75% of per-core VMEM (headroom for compiler scratch / pipelining)."""
    cap = 64 * 1024 * 1024          # conservative default: v7x per-TensorCore VMEM
    try:
        cap = int(pltpu.get_tpu_info().vmem_capacity_bytes)
    except Exception:               # query unavailable -> stay conservative
        pass
    return (cap * 3) // 4


def _vmem_need_bytes(tb, tk, ndf_p, out_p):
    """VMEM footprint: double-buffered streamed operands + resident weights + scratch."""
    x_bytes = 2 * tb * tk * 2                                  # x tile (bf16), double-buffered
    w1_bytes = 2 * tk * ndf_p * 2                              # w1 K-slice (bf16), double-buffered
    w_res = 2 * (2 * ndf_p * ndf_p + ndf_p * out_p) * 2        # w2, w3, w4 (bf16)
    b_res = 2 * (3 * ndf_p + out_p) * 4                        # biases (f32)
    out_bytes = 2 * tb * out_p * 4                             # output tile (f32), double-buffered
    acc_bytes = tb * ndf_p * 4                                 # f32 layer-1 accumulator scratch
    return x_bytes + w1_bytes + w_res + b_res + out_bytes + acc_bytes


def _choose_tk(in_dim_p, tk_max):
    """Largest multiple of 128 that divides in_dim_p exactly and is <= tk_max.

    Exact divisibility keeps the K reduction free of out-of-bounds garbage
    (padded-K contributions would otherwise be summed into real outputs).
    """
    m = in_dim_p // LANE
    cap = max(1, tk_max // LANE)
    best, d = 1, 1
    while d * d <= m:
        if m % d == 0:
            for q in (d, m // d):
                if q <= cap and q > best:
                    best = q
        d += 1
    return best * LANE


def _choose_tb(B, tk, ndf_p, out_p, budget):
    """Largest power-of-two batch tile (<=1024 rows) whose buffers fit `budget`."""
    if B <= 8:
        return B                    # one tile; block dims equal the full array dims
    cap = min(1024, _round_up(B, 8))
    tb, cand = 8, 8
    while cand <= cap:
        if _vmem_need_bytes(cand, tk, ndf_p, out_p) <= budget:
            tb = cand
        cand *= 2
    # Keep >=2 batch tiles (engages the 2nd TensorCore on v7x via the
    # "parallel" batch axis) when the tile stays reasonably large.
    if pl.cdiv(B, tb) < 2 and tb >= 512:
        tb //= 2
    return tb


# ---------------------------------------------------------------------------
# Parameter preparation (done once, outside the training step)
# ---------------------------------------------------------------------------
def _pad2d(a, rows, cols, dtype):
    r, c = a.shape
    return jnp.pad(a, ((0, rows - r), (0, cols - c))).astype(dtype)


def prepare_params(params, in_dim):
    """Pad + cast the weights/biases once.

    Weights are stored transposed, (in_features, out_features), so the kernel
    computes x @ W + b.  Zero padding is exact: padded input/hidden lanes carry
    zero weights and biases, so they stay 0 through every ReLU.
    """
    (w1, b1), (w2, b2), (w3, b3), (w4, b4) = params
    ndf = w1.shape[1]
    in_dim_p = _round_up(in_dim, LANE)
    ndf_p = _round_up(max(ndf, 1), LANE)
    return {
        "in_dim": in_dim, "in_dim_p": in_dim_p, "ndf_p": ndf_p, "out_p": OUT_P,
        "w1": _pad2d(w1, in_dim_p, ndf_p, jnp.bfloat16),
        "b1": _pad2d(b1, 1, ndf_p, jnp.float32),
        "w2": _pad2d(w2, ndf_p, ndf_p, jnp.bfloat16),
        "b2": _pad2d(b2, 1, ndf_p, jnp.float32),
        "w3": _pad2d(w3, ndf_p, ndf_p, jnp.bfloat16),
        "b3": _pad2d(b3, 1, ndf_p, jnp.float32),
        "w4": _pad2d(w4, ndf_p, OUT_P, jnp.bfloat16),
        "b4": _pad2d(b4, 1, OUT_P, jnp.float32),
    }


# ---------------------------------------------------------------------------
# Forward
# ---------------------------------------------------------------------------
def mlp_d_forward(x_nchw, prepped, *, tk_max=4096):
    """Flatten NCHW input (like torch .view(B, -1)) and run the fused MLP kernel."""
    B = x_nchw.shape[0]
    x = x_nchw.reshape(B, -1)
    in_dim, in_dim_p = prepped["in_dim"], prepped["in_dim_p"]
    ndf_p, out_p = prepped["ndf_p"], prepped["out_p"]
    assert x.shape[1] == in_dim, (x.shape, in_dim)

    # x dominates HBM traffic: only touch it when strictly necessary.
    if x.dtype != jnp.bfloat16:
        x = x.astype(jnp.bfloat16)          # pass bf16 upstream to skip this pass
    if in_dim_p != in_dim:
        x = jnp.pad(x, ((0, 0), (0, in_dim_p - in_dim)))   # no-op when in_dim % 128 == 0

    budget = _vmem_budget_bytes()
    tk = _choose_tk(in_dim_p, tk_max)
    tb = _choose_tb(B, tk, ndf_p, out_p, budget)
    nb = pl.cdiv(B, tb)        # partial last batch tile is masked on writeback
    nk = in_dim_p // tk        # tk divides in_dim_p exactly

    need = _vmem_need_bytes(tb, tk, ndf_p, out_p)
    vmem_limit = int(min(budget, max(need + 16 * 2**20, 32 * 2**20)))

    def resident(shape):
        # Weights / biases: same block every grid step -> fetched once, stay in
        # VMEM.  (They keep the default double buffer; the VMEM budget above
        # already accounts for it.)
        return pl.BlockSpec(shape, lambda i, k: (0, 0))

    flops = 2 * B * (in_dim_p * ndf_p + 2 * ndf_p * ndf_p + ndf_p * out_p)
    w_bytes = 2 * (in_dim_p * ndf_p + 2 * ndf_p * ndf_p + ndf_p * out_p)
    b_bytes = 4 * (3 * ndf_p + out_p)
    bytes_accessed = B * in_dim_p * 2 + w_bytes + b_bytes + B * out_p * 4

    out = pl.pallas_call(
        mlp_d_kernel,
        out_shape=jax.ShapeDtypeStruct((B, out_p), jnp.float32),
        grid=(nb, nk),
        in_specs=[
            pl.BlockSpec((tb, tk), lambda i, k: (i, k)),     # x: batch/K-streamed
            pl.BlockSpec((tk, ndf_p), lambda i, k: (k, 0)),  # w1: streamed along K
            resident((1, ndf_p)),
            resident((ndf_p, ndf_p)), resident((1, ndf_p)),
            resident((ndf_p, ndf_p)), resident((1, ndf_p)),
            resident((ndf_p, out_p)), resident((1, out_p)),
        ],
        out_specs=pl.BlockSpec((tb, out_p), lambda i, k: (i, 0)),
        scratch_shapes=[pltpu.VMEM((tb, ndf_p), jnp.float32)],
        compiler_params=pltpu.CompilerParams(
            dimension_semantics=("parallel", "arbitrary"),
            vmem_limit_bytes=vmem_limit,
        ),
        cost_estimate=pl.CostEstimate(
            flops=flops, transcendentals=B * out_p, bytes_accessed=bytes_accessed),
    )(x, prepped["w1"], prepped["b1"], prepped["w2"], prepped["b2"],
      prepped["w3"], prepped["b3"], prepped["w4"], prepped["b4"])

    return out[:, :1]


# ---------------------------------------------------------------------------
# Init + pure-JAX reference
# ---------------------------------------------------------------------------
def init_params(key, in_dim, ndf):
    """Deterministic init mimicking torch.nn.Linear's default U(-1/sqrt(fan_in), +...).

    Weights stored transposed, (in_features, out_features), so forward is x @ W + b.
    """
    dims = [(in_dim, ndf), (ndf, ndf), (ndf, ndf), (ndf, 1)]
    params = []
    for (fan_in, fan_out) in dims:
        key, kw, kb = jax.random.split(key, 3)
        bound = 1.0 / jnp.sqrt(jnp.float32(fan_in))
        w = jax.random.uniform(kw, (fan_in, fan_out), jnp.float32, -bound, bound)
        b = jax.random.uniform(kb, (1, fan_out), jnp.float32, -bound, bound)
        params.append((w, b))
    return params


def reference_forward(x_nchw, params):
    """Plain-JAX f32 reference for sanity checking the kernel."""
    x = x_nchw.reshape(x_nchw.shape[0], -1)
    (w1, b1), (w2, b2), (w3, b3), (w4, b4) = params
    h = jnp.maximum(x @ w1 + b1, 0.0)
    h = jnp.maximum(h @ w2 + b2, 0.0)
    h = jnp.maximum(h @ w3 + b3, 0.0)
    return jax.nn.sigmoid(h @ w4 + b4)


if __name__ == "__main__":
    # Small shapes consistent with MLP_D(isize=16, nc=4, ndf=32), batch=2.
    B, nc, isize, ndf = 2, 4, 16, 32
    in_dim = nc * isize * isize

    key = jax.random.PRNGKey(0)
    key, kx = jax.random.split(key)
    x = jax.random.normal(kx, (B, nc, isize, isize), jnp.float32)

    params = init_params(key, in_dim, ndf)
    prepped = prepare_params(params, in_dim)   # pad/cast weights once

    out = mlp_d_forward(x, prepped)
    out = jax.block_until_ready(out)

    ref = reference_forward(x, params)
    assert out.shape == (B, 1), out.shape
    # bf16 operands + f32 accumulation vs an all-f32 reference.
    assert jnp.allclose(out, ref, atol=2e-2, rtol=2e-2), (out, ref)

    print("KERNEL_OK")
</pallas_src>

<mosaic_0001>
module attributes {stable_mosaic.version = 11 : i64} {
  func.func @mlp_d_kernel(%arg0: i32, %arg1: i32, %arg2: memref<2x1024xbf16, #tpu.memory_space<vmem>>, %arg3: memref<1024x128xbf16, #tpu.memory_space<vmem>>, %arg4: memref<1x128xf32, #tpu.memory_space<vmem>>, %arg5: memref<128x128xbf16, #tpu.memory_space<vmem>>, %arg6: memref<1x128xf32, #tpu.memory_space<vmem>>, %arg7: memref<128x128xbf16, #tpu.memory_space<vmem>>, %arg8: memref<1x128xf32, #tpu.memory_space<vmem>>, %arg9: memref<128x128xbf16, #tpu.memory_space<vmem>>, %arg10: memref<1x128xf32, #tpu.memory_space<vmem>>, %arg11: memref<2x128xf32, #tpu.memory_space<vmem>>, %arg12: memref<2x128xf32, #tpu.memory_space<vmem>>) attributes {dimension_semantics = [#tpu.dimension_semantics<parallel>, #tpu.dimension_semantics<arbitrary>], iteration_bounds = array<i64: 1, 1>, scalar_prefetch = 0 : i64, scratch_operands = 1 : i64, tpu.core_type = #tpu.core_type<tc>, window_params = [{transform_indices = @transform_0, window_bounds = array<i64: 2, 1024>}, {transform_indices = @transform_1, window_bounds = array<i64: 1024, 128>}, {pipeline_mode = #tpu.pipeline_mode<synchronous>, transform_indices = @transform_2, window_bounds = array<i64: 1, 128>}, {pipeline_mode = #tpu.pipeline_mode<synchronous>, transform_indices = @transform_3, window_bounds = array<i64: 128, 128>}, {pipeline_mode = #tpu.pipeline_mode<synchronous>, transform_indices = @transform_4, window_bounds = array<i64: 1, 128>}, {pipeline_mode = #tpu.pipeline_mode<synchronous>, transform_indices = @transform_5, window_bounds = array<i64: 128, 128>}, {pipeline_mode = #tpu.pipeline_mode<synchronous>, transform_indices = @transform_6, window_bounds = array<i64: 1, 128>}, {pipeline_mode = #tpu.pipeline_mode<synchronous>, transform_indices = @transform_7, window_bounds = array<i64: 128, 128>}, {pipeline_mode = #tpu.pipeline_mode<synchronous>, transform_indices = @transform_8, window_bounds = array<i64: 1, 128>}, {transform_indices = @transform_9, window_bounds = array<i64: 2, 128>}]} {
    %c0_i32 = arith.constant 0 : i32
    %0 = arith.cmpi eq, %arg1, %c0_i32 : i32
    %1 = arith.extui %0 : i1 to i32
    %c0_i32_0 = arith.constant 0 : i32
    %2 = arith.cmpi ne, %1, %c0_i32_0 : i32
    scf.if %2 {
      %cst_10 = arith.constant 0.000000e+00 : f32
      %12 = vector.broadcast %cst_10 : f32 to vector<2x128xf32>
      %c0_11 = arith.constant 0 : index
      %c0_12 = arith.constant 0 : index
      %13 = vector.load %arg12[%c0_11, %c0_12] : memref<2x128xf32, #tpu.memory_space<vmem>>, vector<2x128xf32>
      tpu.vector_store %arg12[%c0_11, %c0_12], %12 {strides = array<i32>} : memref<2x128xf32, #tpu.memory_space<vmem>>, vector<2x128xf32>,
    } else {
    }
    %c0 = arith.constant 0 : index
    %c0_1 = arith.constant 0 : index
    %3 = vector.load %arg12[%c0, %c0_1] : memref<2x128xf32, #tpu.memory_space<vmem>>, vector<2x128xf32>
    %c0_2 = arith.constant 0 : index
    %c0_3 = arith.constant 0 : index
    %4 = vector.load %arg2[%c0_2, %c0_3] : memref<2x1024xbf16, #tpu.memory_space<vmem>>, vector<2x1024xbf16>
    %c0_4 = arith.constant 0 : index
    %c0_5 = arith.constant 0 : index
    %5 = vector.load %arg3[%c0_4, %c0_5] : memref<1024x128xbf16, #tpu.memory_space<vmem>>, vector<1024x128xbf16>
    %cst = arith.constant dense<0.000000e+00> : vector<2x128xf32>
    %6 = tpu.matmul %4, %5, %cst {dimension_numbers = #tpu.dot_dimension_numbers<[1], [0], [0], [1], [0, 0, 1, 1], [], []>} : vector<2x1024xbf16>, vector<1024x128xbf16>, vector<2x128xf32> -> vector<2x128xf32>
    %7 = arith.addf %3, %6 : vector<2x128xf32>
    %c0_6 = arith.constant 0 : index
    %c0_7 = arith.constant 0 : index
    %8 = vector.load %arg12[%c0_6, %c0_7] : memref<2x128xf32, #tpu.memory_space<vmem>>, vector<2x128xf32>
    tpu.vector_store %arg12[%c0_6, %c0_7], %7 {strides = array<i32>} : memref<2x128xf32, #tpu.memory_space<vmem>>, vector<2x128xf32>,
    %c0_i32_8 = arith.constant 0 : i32
    %9 = arith.cmpi eq, %arg1, %c0_i32_8 : i32
    %10 = arith.extui %9 : i1 to i32
    %c0_i32_9 = arith.constant 0 : i32
    %11 = arith.cmpi ne, %10, %c0_i32_9 : i32
    scf.if %11 {
      %c0_10 = arith.constant 0 : index
      %c0_11 = arith.constant 0 : index
      %12 = vector.load %arg12[%c0_10, %c0_11] : memref<2x128xf32, #tpu.memory_space<vmem>>, vector<2x128xf32>
      %c0_12 = arith.constant 0 : index
      %c0_13 = arith.constant 0 : index
      %13 = vector.load %arg4[%c0_12, %c0_13] : memref<1x128xf32, #tpu.memory_space<vmem>>, vector<1x128xf32>
      %14 = vector.broadcast %13 : vector<1x128xf32> to vector<2x128xf32>
      %15 = arith.addf %12, %14 : vector<2x128xf32>
      %cst_14 = arith.constant 0.000000e+00 : f32
      %16 = vector.broadcast %cst_14 : f32 to vector<2x128xf32>
      %17 = arith.maximumf %15, %16 : vector<2x128xf32>
      %18 = arith.truncf %17 : vector<2x128xf32> to vector<2x128xbf16>
      %c0_15 = arith.constant 0 : index
      %c0_16 = arith.constant 0 : index
      %19 = vector.load %arg5[%c0_15, %c0_16] : memref<128x128xbf16, #tpu.memory_space<vmem>>, vector<128x128xbf16>
      %cst_17 = arith.constant dense<0.000000e+00> : vector<2x128xf32>
      %20 = tpu.matmul %18, %19, %cst_17 {dimension_numbers = #tpu.dot_dimension_numbers<[1], [0], [0], [1], [0, 0, 1, 1], [], []>} : vector<2x128xbf16>, vector<128x128xbf16>, vector<2x128xf32> -> vector<2x128xf32>
      %c0_18 = arith.constant 0 : index
      %c0_19 = arith.constant 0 : index
      %21 = vector.load %arg6[%c0_18, %c0_19] : memref<1x128xf32, #tpu.memory_space<vmem>>, vector<1x128xf32>
      %22 = vector.broadcast %21 : vector<1x128xf32> to vector<2x128xf32>
      %23 = arith.addf %20, %22 : vector<2x128xf32>
      %cst_20 = arith.constant 0.000000e+00 : f32
      %24 = vector.broadcast %cst_20 : f32 to vector<2x128xf32>
      %25 = arith.maximumf %23, %24 : vector<2x128xf32>
      %26 = arith.truncf %25 : vector<2x128xf32> to vector<2x128xbf16>
      %c0_21 = arith.constant 0 : index
      %c0_22 = arith.constant 0 : index
      %27 = vector.load %arg7[%c0_21, %c0_22] : memref<128x128xbf16, #tpu.memory_space<vmem>>, vector<128x128xbf16>
      %cst_23 = arith.constant dense<0.000000e+00> : vector<2x128xf32>
      %28 = tpu.matmul %26, %27, %cst_23 {dimension_numbers = #tpu.dot_dimension_numbers<[1], [0], [0], [1], [0, 0, 1, 1], [], []>} : vector<2x128xbf16>, vector<128x128xbf16>, vector<2x128xf32> -> vector<2x128xf32>
      %c0_24 = arith.constant 0 : index
      %c0_25 = arith.constant 0 : index
      %29 = vector.load %arg8[%c0_24, %c0_25] : memref<1x128xf32, #tpu.memory_space<vmem>>, vector<1x128xf32>
      %30 = vector.broadcast %29 : vector<1x128xf32> to vector<2x128xf32>
      %31 = arith.addf %28, %30 : vector<2x128xf32>
      %cst_26 = arith.constant 0.000000e+00 : f32
      %32 = vector.broadcast %cst_26 : f32 to vector<2x128xf32>
      %33 = arith.maximumf %31, %32 : vector<2x128xf32>
      %34 = arith.truncf %33 : vector<2x128xf32> to vector<2x128xbf16>
      %c0_27 = arith.constant 0 : index
      %c0_28 = arith.constant 0 : index
      %35 = vector.load %arg9[%c0_27, %c0_28] : memref<128x128xbf16, #tpu.memory_space<vmem>>, vector<128x128xbf16>
      %cst_29 = arith.constant dense<0.000000e+00> : vector<2x128xf32>
      %36 = tpu.matmul %34, %35, %cst_29 {dimension_numbers = #tpu.dot_dimension_numbers<[1], [0], [0], [1], [0, 0, 1, 1], [], []>} : vector<2x128xbf16>, vector<128x128xbf16>, vector<2x128xf32> -> vector<2x128xf32>
      %c0_30 = arith.constant 0 : index
      %c0_31 = arith.constant 0 : index
      %37 = vector.load %arg10[%c0_30, %c0_31] : memref<1x128xf32, #tpu.memory_space<vmem>>, vector<1x128xf32>
      %38 = vector.broadcast %37 : vector<1x128xf32> to vector<2x128xf32>
      %39 = arith.addf %36, %38 : vector<2x128xf32>
      %40 = arith.negf %39 : vector<2x128xf32>
      %41 = math.exp %40 : vector<2x128xf32>
      %cst_32 = arith.constant 1.000000e+00 : f32
      %42 = vector.broadcast %cst_32 : f32 to vector<2x128xf32>
      %43 = arith.addf %42, %41 : vector<2x128xf32>
      %44 = arith.divf %42, %43 : vector<2x128xf32>
      %c0_33 = arith.constant 0 : index
      %c0_34 = arith.constant 0 : index
      %45 = vector.load %arg11[%c0_33, %c0_34] : memref<2x128xf32, #tpu.memory_space<vmem>>, vector<2x128xf32>
      tpu.vector_store %arg11[%c0_33, %c0_34], %44 {strides = array<i32>} : memref<2x128xf32, #tpu.memory_space<vmem>>, vector<2x128xf32>,
    } else {
    }
    return
  }
  func.func @transform_0(%arg0: i32, %arg1: i32) -> (i32, i32) {
    %c0_i32 = arith.constant 0 : i32
    return %arg0, %arg1 : i32, i32
  }
  func.func @transform_1(%arg0: i32, %arg1: i32) -> (i32, i32) {
    %c0_i32 = arith.constant 0 : i32
    %c0_i32_0 = arith.constant 0 : i32
    return %arg1, %c0_i32 : i32, i32
  }
  func.func @transform_2(%arg0: i32, %arg1: i32) -> (i32, i32) {
    %c0_i32 = arith.constant 0 : i32
    %c0_i32_0 = arith.constant 0 : i32
    %c0_i32_1 = arith.constant 0 : i32
    return %c0_i32, %c0_i32_0 : i32, i32
  }
  func.func @transform_3(%arg0: i32, %arg1: i32) -> (i32, i32) {
    %c0_i32 = arith.constant 0 : i32
    %c0_i32_0 = arith.constant 0 : i32
    %c0_i32_1 = arith.constant 0 : i32
    return %c0_i32, %c0_i32_0 : i32, i32
  }
  func.func @transform_4(%arg0: i32, %arg1: i32) -> (i32, i32) {
    %c0_i32 = arith.constant 0 : i32
    %c0_i32_0 = arith.constant 0 : i32
    %c0_i32_1 = arith.constant 0 : i32
    return %c0_i32, %c0_i32_0 : i32, i32
  }
  func.func @transform_5(%arg0: i32, %arg1: i32) -> (i32, i32) {
    %c0_i32 = arith.constant 0 : i32
    %c0_i32_0 = arith.constant 0 : i32
    %c0_i32_1 = arith.constant 0 : i32
    return %c0_i32, %c0_i32_0 : i32, i32
  }
  func.func @transform_6(%arg0: i32, %arg1: i32) -> (i32, i32) {
    %c0_i32 = arith.constant 0 : i32
    %c0_i32_0 = arith.constant 0 : i32
    %c0_i32_1 = arith.constant 0 : i32
    return %c0_i32, %c0_i32_0 : i32, i32
  }
  func.func @transform_7(%arg0: i32, %arg1: i32) -> (i32, i32) {
    %c0_i32 = arith.constant 0 : i32
    %c0_i32_0 = arith.constant 0 : i32
    %c0_i32_1 = arith.constant 0 : i32
    return %c0_i32, %c0_i32_0 : i32, i32
  }
  func.func @transform_8(%arg0: i32, %arg1: i32) -> (i32, i32) {
    %c0_i32 = arith.constant 0 : i32
    %c0_i32_0 = arith.constant 0 : i32
    %c0_i32_1 = arith.constant 0 : i32
    return %c0_i32, %c0_i32_0 : i32, i32
  }
  func.func @transform_9(%arg0: i32, %arg1: i32) -> (i32, i32) {
    %c0_i32 = arith.constant 0 : i32
    %c0_i32_0 = arith.constant 0 : i32
    return %arg0, %c0_i32 : i32, i32
  }
}

</mosaic_0001>

<llo_original>
// kernel: tpu_custom_call.1
$region0: #{tpu_custom_call.1}
  #allocation0 [shape = 'u32[]', space=smem, size = 0x4, offset = 0x4, fixed_abs, tag = 'smem constant byte address 0x4 - core index']
  #allocation1 [shape = 'u32[144,128]{1,0:T(1,128)}', space=vmem, size = 0x12000, scoped, tag = 'internal scratch']
  #allocation2 [shape = 'f32[2,128]{1,0:T(2,128)}', space=vmem, size = 0x400, scoped, tag = 'scratch operand']
  %s0 = inlined_call_operand.hbm [shape: bf16[2,1024], index: 0, kind: input, shape index: {}]
  %s1 = inlined_call_operand.hbm [shape: bf16[1024,128], index: 1, kind: input, shape index: {}]
  %s2 = inlined_call_operand.vmem [shape: f32[1,128], index: 2, kind: input, shape index: {}]
  %s3 = inlined_call_operand.hbm [shape: bf16[128,128], index: 3, kind: input, shape index: {}]
  %s4 = inlined_call_operand.vmem [shape: f32[1,128], index: 4, kind: input, shape index: {}]
  %s5 = inlined_call_operand.hbm [shape: bf16[128,128], index: 5, kind: input, shape index: {}]
  %s6 = inlined_call_operand.vmem [shape: f32[1,128], index: 6, kind: input, shape index: {}]
  %s7 = inlined_call_operand.hbm [shape: bf16[128,128], index: 7, kind: input, shape index: {}]
  %s8 = inlined_call_operand.vmem [shape: f32[1,128], index: 8, kind: input, shape index: {}]
  %s9 = inlined_call_operand.hbm [shape: f32[2,128], index: 9, kind: output, shape index: {}]
  %s10 = sld [smem:[#allocation0]]
  $region74: #{tpu_custom_call.1} parent=0
    _
  %s12 = ssub.s32 1, %s10
  %s13 = scalar_select 0, %s12, %s10
  $region1: #{tpu_custom_call.1} parent=0
    #allocation3 [shape = 'u8[4096]{0}', space=vmem, size = 0x1000, scoped, tag = 'input window, operand 0, single buffered']
    #allocation4 [shape = 's32[1]{0}', space=sflag, size = 0x4, scoped, tag = 'scoped memory for tpu_custom_call.1']
    #allocation5 [shape = 's32[1]{0}', space=sflag, size = 0x4, scoped, tag = 'scoped memory for tpu_custom_call.1']
    #allocation6 [shape = 'u8[262144]{0}', space=vmem, size = 0x40000, scoped, tag = 'input window, operand 1, single buffered']
    #allocation7 [shape = 's32[1]{0}', space=sflag, size = 0x4, scoped, tag = 'scoped memory for tpu_custom_call.1']
    #allocation8 [shape = 'u8[32768]{0}', space=vmem, size = 0x8000, scoped, tag = 'input window, operand 3, single buffered']
    #allocation9 [shape = 'u8[32768]{0}', space=vmem, size = 0x8000, scoped, tag = 'input window, operand 5, single buffered']
    #allocation10 [shape = 's32[1]{0}', space=sflag, size = 0x4, scoped, tag = 'scoped memory for tpu_custom_call.1']
    #allocation11 [shape = 'u8[32768]{0}', space=vmem, size = 0x8000, scoped, tag = 'input window, operand 7, single buffered']
    #allocation12 [shape = 'u8[1024]{0}', space=vmem, size = 0x400, scoped, tag = 'output window, operand 0, single buffered']
    %14 = vsyncpa [#allocation4], 0
    %15 = vsyncpa [#allocation7], 0
    %16 = vsyncpa [#allocation10], 0
    %17 = vsyncpa [#allocation5], 0
    // Predicated region
    $region2: #{tpu_custom_call.1} parent=1 // pred_check
      _
    $region3: #{tpu_custom_call.1} parent=1 // pred_check_branch
      %19 = sbr.rel (0) target = $region5
    $region4: #{tpu_custom_call.1} parent=1 // pred_region
      %s21 = ssub.s32 128, 128
      %22 = vsyncadd [#allocation4], %s21
      %s24 = sshll.u32 [#allocation3], 4
      %s25 = int_to_ptr.vmem [resolvable:$true] %s24
      %27 = dma.hbm_to_vmem [thread:$0]  %s0, 128, %s25, [#allocation4]
    $region5: #{tpu_custom_call.1} parent=1 // pred_fallthru
      _
    // Predicated region
    $region6: #{tpu_custom_call.1} parent=1 // pred_check
      _
    $region7: #{tpu_custom_call.1} parent=1 // pred_check_branch
      %29 = sbr.rel (0) target = $region9
    $region8: #{tpu_custom_call.1} parent=1 // pred_region
      %s31 = ssub.s32 8192, 8192
      %32 = vsyncadd [#allocation7], %s31
      %s33 = sshll.u32 [#allocation6], 4
      %s34 = int_to_ptr.vmem [resolvable:$true] %s33
      %39 = dma.hbm_to_vmem [thread:$0]  %s1, 8192, %s34, [#allocation7], 64, 64, 4
    $region9: #{tpu_custom_call.1} parent=1 // pred_fallthru
      _
    // Predicated region
    $region10: #{tpu_custom_call.1} parent=1 // pred_check
      _
    $region11: #{tpu_custom_call.1} parent=1 // pred_check_branch
      %41 = sbr.rel (0) target = $region13
    $region12: #{tpu_custom_call.1} parent=1 // pred_region
      _
    $region13: #{tpu_custom_call.1} parent=1 // pred_fallthru
      _
    // Predicated region
    $region14: #{tpu_custom_call.1} parent=1 // pred_check
      _
    $region15: #{tpu_custom_call.1} parent=1 // pred_check_branch
      %43 = sbr.rel (0) target = $region17
    $region16: #{tpu_custom_call.1} parent=1 // pred_region
      %s45 = ssub.s32 1024, 1024
      %46 = vsyncadd [#allocation7], %s45
      %s47 = sshll.u32 [#allocation8], 4
      %s48 = int_to_ptr.vmem [resolvable:$true] %s47
      %53 = dma.hbm_to_vmem [thread:$0]  %s3, 1024, %s48, [#allocation7], 64, 64, 4
    $region17: #{tpu_custom_call.1} parent=1 // pred_fallthru
      _
    // Predicated region
    $region18: #{tpu_custom_call.1} parent=1 // pred_check
      _
    $region19: #{tpu_custom_call.1} parent=1 // pred_check_branch
      %55 = sbr.rel (0) target = $region21
    $region20: #{tpu_custom_call.1} parent=1 // pred_region
      _
    $region21: #{tpu_custom_call.1} parent=1 // pred_fallthru
      _
    // Predicated region
    $region22: #{tpu_custom_call.1} parent=1 // pred_check
      _
    $region23: #{tpu_custom_call.1} parent=1 // pred_check_branch
      %57 = sbr.rel (0) target = $region25
    $region24: #{tpu_custom_call.1} parent=1 // pred_region
      %s59 = ssub.s32 1024, 1024
      %60 = vsyncadd [#allocation10], %s59
      %s61 = sshll.u32 [#allocation9], 4
      %s62 = int_to_ptr.vmem [resolvable:$true] %s61
      %67 = dma.hbm_to_vmem [thread:$0]  %s5, 1024, %s62, [#allocation10], 64, 64, 4
    $region25: #{tpu_custom_call.1} parent=1 // pred_fallthru
      _
    // Predicated region
    $region26: #{tpu_custom_call.1} parent=1 // pred_check
      _
    $region27: #{tpu_custom_call.1} parent=1 // pred_check_branch
      %69 = sbr.rel (0) target = $region29
    $region28: #{tpu_custom_call.1} parent=1 // pred_region
      _
    $region29: #{tpu_custom_call.1} parent=1 // pred_fallthru
      _
    // Predicated region
    $region30: #{tpu_custom_call.1} parent=1 // pred_check
      _
    $region31: #{tpu_custom_call.1} parent=1 // pred_check_branch
      %71 = sbr.rel (0) target = $region33
    $region32: #{tpu_custom_call.1} parent=1 // pred_region
      %s73 = ssub.s32 1024, 1024
      %74 = vsyncadd [#allocation10], %s73
      %s75 = sshll.u32 [#allocation11], 4
      %s76 = int_to_ptr.vmem [resolvable:$true] %s75
      %81 = dma.hbm_to_vmem [thread:$0]  %s7, 1024, %s76, [#allocation10], 64, 64, 4
    $region33: #{tpu_custom_call.1} parent=1 // pred_fallthru
      _
    // Predicated region
    $region34: #{tpu_custom_call.1} parent=1 // pred_check
      _
    $region35: #{tpu_custom_call.1} parent=1 // pred_check_branch
      %83 = sbr.rel (0) target = $region37
    $region36: #{tpu_custom_call.1} parent=1 // pred_region
      _
    $region37: #{tpu_custom_call.1} parent=1 // pred_fallthru
      _
    // Predicated region
    $region38: #{tpu_custom_call.1} parent=1 // pred_check
      _
    $region39: #{tpu_custom_call.1} parent=1 // pred_check_branch
      %85 = sbr.rel (0) target = $region41
    $region40: #{tpu_custom_call.1} parent=1 // pred_region
      %86 = dma.done [#allocation4], 128
    $region41: #{tpu_custom_call.1} parent=1 // pred_fallthru
      _
    // Predicated region
    $region42: #{tpu_custom_call.1} parent=1 // pred_check
      _
    $region43: #{tpu_custom_call.1} parent=1 // pred_check_branch
      %88 = sbr.rel (0) target = $region45
    $region44: #{tpu_custom_call.1} parent=1 // pred_region
      %89 = dma.done [#allocation7], 8192
    $region45: #{tpu_custom_call.1} parent=1 // pred_fallthru
      _
    // Predicated region
    $region46: #{tpu_custom_call.1} parent=1 // pred_check
      _
    $region47: #{tpu_custom_call.1} parent=1 // pred_check_branch
      %91 = sbr.rel (0) target = $region49
    $region48: #{tpu_custom_call.1} parent=1 // pred_region
      %92 = dma.done [#allocation7], 1024
    $region49: #{tpu_custom_call.1} parent=1 // pred_fallthru
      _
    // Predicated region
    $region50: #{tpu_custom_call.1} parent=1 // pred_check
      _
    $region51: #{tpu_custom_call.1} parent=1 // pred_check_branch
      %94 = sbr.rel (0) target = $region53
    $region52: #{tpu_custom_call.1} parent=1 // pred_region
      %95 = dma.done [#allocation10], 1024
    $region53: #{tpu_custom_call.1} parent=1 // pred_fallthru
      _
    // Predicated region
    $region54: #{tpu_custom_call.1} parent=1 // pred_check
      _
    $region55: #{tpu_custom_call.1} parent=1 // pred_check_branch
      %97 = sbr.rel (0) target = $region57
    $region56: #{tpu_custom_call.1} parent=1 // pred_region
      %98 = dma.done [#allocation10], 1024
    $region57: #{tpu_custom_call.1} parent=1 // pred_fallthru
      _
    %p100 = scmp.eq.s32.totalorder 0, 0
    // Predicated region
    $region58: #{tpu_custom_call.1} parent=1 // pred_check
      %p101 = pneg %p100
    $region59: #{tpu_custom_call.1} parent=1 // pred_check_branch
      %103 = sbr.rel (%p101) target = $region61
    $region60: #{tpu_custom_call.1} parent=1 // pred_region
      %104 = vst [vmem:[#allocation2] sm:$0x3] 0.0
    $region61: #{tpu_custom_call.1} parent=1 // pred_fallthru
      _
    %v105 = vld [vmem:[#allocation2] sm:$0x3]
    %v106 = vld [vmem:[#allocation3] sm:$0xff]
    %v107 = vld [vmem:[#allocation6] sm:$0xf]
    %v108 = vld [vmem:[#allocation6 + $0x4] sm:$0xf]
    %v109 = vld [vmem:[#allocation6 + $0x8] sm:$0xf]
    %v110 = vld [vmem:[#allocation6 + $0xc] sm:$0xf]
    %v111 = vld [vmem:[#allocation6 + $0x10] sm:$0xf]
    %v112 = vld [vmem:[#allocation6 + $0x14] sm:$0xf]
    %v113 = vld [vmem:[#allocation6 + $0x18] sm:$0xf]
    %v114 = vld [vmem:[#allocation6 + $0x1c] sm:$0xf]
    %v115 = vld [vmem:[#allocation6 + $0x20] sm:$0xf]
    %v116 = vld [vmem:[#allocation6 + $0x24] sm:$0xf]
    %v117 = vld [vmem:[#allocation6 + $0x28] sm:$0xf]
    %v118 = vld [vmem:[#allocation6 + $0x2c] sm:$0xf]
    %v119 = vld [vmem:[#allocation6 + $0x30] sm:$0xf]
    %v120 = vld [vmem:[#allocation6 + $0x34] sm:$0xf]
    %v121 = vld [vmem:[#allocation6 + $0x38] sm:$0xf]
    %v122 = vld [vmem:[#allocation6 + $0x3c] sm:$0xf]
    %v123 = vld [vmem:[#allocation6 + $0x40] sm:$0xf]
    %v124 = vld [vmem:[#allocation6 + $0x44] sm:$0xf]
    %v125 = vld [vmem:[#allocation6 + $0x48] sm:$0xf]
    %v126 = vld [vmem:[#allocation6 + $0x4c] sm:$0xf]
    %v127 = vld [vmem:[#allocation6 + $0x50] sm:$0xf]
    %v128 = vld [vmem:[#allocation6 + $0x54] sm:$0xf]
    %v129 = vld [vmem:[#allocation6 + $0x58] sm:$0xf]
    %v130 = vld [vmem:[#allocation6 + $0x5c] sm:$0xf]
    %v131 = vld [vmem:[#allocation6 + $0x60] sm:$0xf]
    %v132 = vld [vmem:[#allocation6 + $0x64] sm:$0xf]
    %v133 = vld [vmem:[#allocation6 + $0x68] sm:$0xf]
    %v134 = vld [vmem:[#allocation6 + $0x6c] sm:$0xf]
    %v135 = vld [vmem:[#allocation6 + $0x70] sm:$0xf]
    %v136 = vld [vmem:[#allocation6 + $0x74] sm:$0xf]
    %v137 = vld [vmem:[#allocation6 + $0x78] sm:$0xf]
    %v138 = vld [vmem:[#allocation6 + $0x7c] sm:$0xf]
    %v139 = vld [vmem:[#allocation6 + $0x80] sm:$0xf]
    %v140 = vld [vmem:[#allocation6 + $0x84] sm:$0xf]
    %v141 = vld [vmem:[#allocation6 + $0x88] sm:$0xf]
    %v142 = vld [vmem:[#allocation6 + $0x8c] sm:$0xf]
    %v143 = vld [vmem:[#allocation6 + $0x90] sm:$0xf]
    %v144 = vld [vmem:[#allocation6 + $0x94] sm:$0xf]
    %v145 = vld [vmem:[#allocation6 + $0x98] sm:$0xf]
    %v146 = vld [vmem:[#allocation6 + $0x9c] sm:$0xf]
    %v147 = vld [vmem:[#allocation6 + $0xa0] sm:$0xf]
    %v148 = vld [vmem:[#allocation6 + $0xa4] sm:$0xf]
    %v149 = vld [vmem:[#allocation6 + $0xa8] sm:$0xf]
    %v150 = vld [vmem:[#allocation6 + $0xac] sm:$0xf]
    %v151 = vld [vmem:[#allocation6 + $0xb0] sm:$0xf]
    %v152 = vld [vmem:[#allocation6 + $0xb4] sm:$0xf]
    %v153 = vld [vmem:[#allocation6 + $0xb8] sm:$0xf]
    %v154 = vld [vmem:[#allocation6 + $0xbc] sm:$0xf]
    %v155 = vld [vmem:[#allocation6 + $0xc0] sm:$0xf]
    %v156 = vld [vmem:[#allocation6 + $0xc4] sm:$0xf]
    %v157 = vld [vmem:[#allocation6 + $0xc8] sm:$0xf]
    %v158 = vld [vmem:[#allocation6 + $0xcc] sm:$0xf]
    %v159 = vld [vmem:[#allocation6 + $0xd0] sm:$0xf]
    %v160 = vld [vmem:[#allocation6 + $0xd4] sm:$0xf]
    %v161 = vld [vmem:[#allocation6 + $0xd8] sm:$0xf]
    %v162 = vld [vmem:[#allocation6 + $0xdc] sm:$0xf]
    %v163 = vld [vmem:[#allocation6 + $0xe0] sm:$0xf]
    %v164 = vld [vmem:[#allocation6 + $0xe4] sm:$0xf]
    %v165 = vld [vmem:[#allocation6 + $0xe8] sm:$0xf]
    %v166 = vld [vmem:[#allocation6 + $0xec] sm:$0xf]
    %v167 = vld [vmem:[#allocation6 + $0xf0] sm:$0xf]
    %v168 = vld [vmem:[#allocation6 + $0xf4] sm:$0xf]
    %v169 = vld [vmem:[#allocation6 + $0xf8] sm:$0xf]
    %v170 = vld [vmem:[#allocation6 + $0xfc] sm:$0xf]
    %v171 = vld [vmem:[#allocation6 + $0x100] sm:$0xf]
    %v172 = vld [vmem:[#allocation6 + $0x104] sm:$0xf]
    %v173 = vld [vmem:[#allocation6 + $0x108] sm:$0xf]
    %v174 = vld [vmem:[#allocation6 + $0x10c] sm:$0xf]
    %v175 = vld [vmem:[#allocation6 + $0x110] sm:$0xf]
    %v176 = vld [vmem:[#allocation6 + $0x114] sm:$0xf]
    %v177 = vld [vmem:[#allocation6 + $0x118] sm:$0xf]
    %v178 = vld [vmem:[#allocation6 + $0x11c] sm:$0xf]
    %v179 = vld [vmem:[#allocation6 + $0x120] sm:$0xf]
    %v180 = vld [vmem:[#allocation6 + $0x124] sm:$0xf]
    %v181 = vld [vmem:[#allocation6 + $0x128] sm:$0xf]
    %v182 = vld [vmem:[#allocation6 + $0x12c] sm:$0xf]
    %v183 = vld [vmem:[#allocation6 + $0x130] sm:$0xf]
    %v184 = vld [vmem:[#allocation6 + $0x134] sm:$0xf]
    %v185 = vld [vmem:[#allocation6 + $0x138] sm:$0xf]
    %v186 = vld [vmem:[#allocation6 + $0x13c] sm:$0xf]
    %v187 = vld [vmem:[#allocation6 + $0x140] sm:$0xf]
    %v188 = vld [vmem:[#allocation6 + $0x144] sm:$0xf]
    %v189 = vld [vmem:[#allocation6 + $0x148] sm:$0xf]
    %v190 = vld [vmem:[#allocation6 + $0x14c] sm:$0xf]
    %v191 = vld [vmem:[#allocation6 + $0x150] sm:$0xf]
    %v192 = vld [vmem:[#allocation6 + $0x154] sm:$0xf]
    %v193 = vld [vmem:[#allocation6 + $0x158] sm:$0xf]
    %v194 = vld [vmem:[#allocation6 + $0x15c] sm:$0xf]
    %v195 = vld [vmem:[#allocation6 + $0x160] sm:$0xf]
    %v196 = vld [vmem:[#allocation6 + $0x164] sm:$0xf]
    %v197 = vld [vmem:[#allocation6 + $0x168] sm:$0xf]
    %v198 = vld [vmem:[#allocation6 + $0x16c] sm:$0xf]
    %v199 = vld [vmem:[#allocation6 + $0x170] sm:$0xf]
    %v200 = vld [vmem:[#allocation6 + $0x174] sm:$0xf]
    %v201 = vld [vmem:[#allocation6 + $0x178] sm:$0xf]
    %v202 = vld [vmem:[#allocation6 + $0x17c] sm:$0xf]
    %v203 = vld [vmem:[#allocation6 + $0x180] sm:$0xf]
    %v204 = vld [vmem:[#allocation6 + $0x184] sm:$0xf]
    %v205 = vld [vmem:[#allocation6 + $0x188] sm:$0xf]
    %v206 = vld [vmem:[#allocation6 + $0x18c] sm:$0xf]
    %v207 = vld [vmem:[#allocation6 + $0x190] sm:$0xf]
    %v208 = vld [vmem:[#allocation6 + $0x194] sm:$0xf]
    %v209 = vld [vmem:[#allocation6 + $0x198] sm:$0xf]
    %v210 = vld [vmem:[#allocation6 + $0x19c] sm:$0xf]
    %v211 = vld [vmem:[#allocation6 + $0x1a0] sm:$0xf]
    %v212 = vld [vmem:[#allocation6 + $0x1a4] sm:$0xf]
    %v213 = vld [vmem:[#allocation6 + $0x1a8] sm:$0xf]
    %v214 = vld [vmem:[#allocation6 + $0x1ac] sm:$0xf]
    %v215 = vld [vmem:[#allocation6 + $0x1b0] sm:$0xf]
    %v216 = vld [vmem:[#allocation6 + $0x1b4] sm:$0xf]
    %v217 = vld [vmem:[#allocation6 + $0x1b8] sm:$0xf]
    %v218 = vld [vmem:[#allocation6 + $0x1bc] sm:$0xf]
    %v219 = vld [vmem:[#allocation6 + $0x1c0] sm:$0xf]
    %v220 = vld [vmem:[#allocation6 + $0x1c4] sm:$0xf]
    %v221 = vld [vmem:[#allocation6 + $0x1c8] sm:$0xf]
    %v222 = vld [vmem:[#allocation6 + $0x1cc] sm:$0xf]
    %v223 = vld [vmem:[#allocation6 + $0x1d0] sm:$0xf]
    %v224 = vld [vmem:[#allocation6 + $0x1d4] sm:$0xf]
    %v225 = vld [vmem:[#allocation6 + $0x1d8] sm:$0xf]
    %v226 = vld [vmem:[#allocation6 + $0x1dc] sm:$0xf]
    %v227 = vld [vmem:[#allocation6 + $0x1e0] sm:$0xf]
    %v228 = vld [vmem:[#allocation6 + $0x1e4] sm:$0xf]
    %v229 = vld [vmem:[#allocation6 + $0x1e8] sm:$0xf]
    %v230 = vld [vmem:[#allocation6 + $0x1ec] sm:$0xf]
    %v231 = vld [vmem:[#allocation6 + $0x1f0] sm:$0xf]
    %v232 = vld [vmem:[#allocation6 + $0x1f4] sm:$0xf]
    %v233 = vld [vmem:[#allocation6 + $0x1f8] sm:$0xf]
    %v234 = vld [vmem:[#allocation6 + $0x1fc] sm:$0xf]
    %v236 = vcombine.high %v106, %v106
    %v238 = vunpack.c.l.s4 1966171168
    %v239 = vunpack.c.0.s8 %v238
    %v240 = vlaneseq
    %v241 = vshrl.u32 %v240, 7
    %v242 = vsub.s32 %v239, %v241
    %v243 = vrot.slane %v106, %v242
    %v245 = vunpack.c.l.s4 1966171168
    %v246 = vunpack.c.0.s8 %v245
    %v247 = vlaneseq
    %v248 = vshrl.u32 %v247, 7
    %v249 = vsub.s32 %v246, %v248
    %v250 = vrot.slane %v236, %v249
    %v251 = vcombine.high %v243, %v243
    %v252 = vcombine.high %v250, %v250
    %v254 = vunpack.c.l.s4 1966171168
    %v255 = vunpack.c.0.s8 %v254
    %v256 = vlaneseq
    %v257 = vshrl.u32 %v256, 7
    %v258 = vsub.s32 %v255, %v257
    %v259 = vrot.slane %v243, %v258
    %v261 = vunpack.c.l.s4 1966171168
    %v262 = vunpack.c.0.s8 %v261
    %v263 = vlaneseq
    %v264 = vshrl.u32 %v263, 7
    %v265 = vsub.s32 %v262, %v264
    %v266 = vrot.slane %v250, %v265
    %v268 = vunpack.c.l.s4 1966171168
    %v269 = vunpack.c.0.s8 %v268
    %v270 = vlaneseq
    %v271 = vshrl.u32 %v270, 7
    %v272 = vsub.s32 %v269, %v271
    %v273 = vrot.slane %v251, %v272
    %v275 = vunpack.c.l.s4 1966171168
    %v276 = vunpack.c.0.s8 %v275
    %v277 = vlaneseq
    %v278 = vshrl.u32 %v277, 7
    %v279 = vsub.s32 %v276, %v278
    %v280 = vrot.slane %v252, %v279
    %v281 = vcombine.high %v259, %v259
    %v282 = vcombine.high %v266, %v266
    %v283 = vcombine.high %v273, %v273
    %v284 = vcombine.high %v280, %v280
    %v421 = vunpack.c.l.b16 %v107
    %v422 = vunpack.c.l.b16 %v108
    %v423 = vunpack.c.l.b16 %v109
    %v424 = vunpack.c.l.b16 %v110
    %v425 = vunpack.c.l.b16 %v111
    %v426 = vunpack.c.l.b16 %v112
    %v427 = vunpack.c.l.b16 %v113
    %v428 = vunpack.c.l.b16 %v114
    %v429 = vunpack.c.l.b16 %v115
    %v430 = vunpack.c.l.b16 %v116
    %v431 = vunpack.c.l.b16 %v117
    %v432 = vunpack.c.l.b16 %v118
    %v433 = vunpack.c.l.b16 %v119
    %v434 = vunpack.c.l.b16 %v120
    %v435 = vunpack.c.l.b16 %v121
    %v436 = vunpack.c.l.b16 %v122
    %v437 = vunpack.c.l.b16 %v123
    %v438 = vunpack.c.l.b16 %v124
    %v439 = vunpack.c.l.b16 %v125
    %v440 = vunpack.c.l.b16 %v126
    %v441 = vunpack.c.l.b16 %v127
    %v442 = vunpack.c.l.b16 %v128
    %v443 = vunpack.c.l.b16 %v129
    %v444 = vunpack.c.l.b16 %v130
    %v445 = vunpack.c.l.b16 %v131
    %v446 = vunpack.c.l.b16 %v132
    %v447 = vunpack.c.l.b16 %v133
    %v448 = vunpack.c.l.b16 %v134
    %v449 = vunpack.c.l.b16 %v135
    %v450 = vunpack.c.l.b16 %v136
    %v451 = vunpack.c.l.b16 %v137
    %v452 = vunpack.c.l.b16 %v138
    %v453 = vunpack.c.l.b16 %v139
    %v454 = vunpack.c.l.b16 %v140
    %v455 = vunpack.c.l.b16 %v141
    %v456 = vunpack.c.l.b16 %v142
    %v457 = vunpack.c.l.b16 %v143
    %v458 = vunpack.c.l.b16 %v144
    %v459 = vunpack.c.l.b16 %v145
    %v460 = vunpack.c.l.b16 %v146
    %v461 = vunpack.c.l.b16 %v147
    %v462 = vunpack.c.l.b16 %v148
    %v463 = vunpack.c.l.b16 %v149
    %v464 = vunpack.c.l.b16 %v150
    %v465 = vunpack.c.l.b16 %v151
    %v466 = vunpack.c.l.b16 %v152
    %v467 = vunpack.c.l.b16 %v153
    %v468 = vunpack.c.l.b16 %v154
    %v469 = vunpack.c.l.b16 %v155
    %v470 = vunpack.c.l.b16 %v156
    %v471 = vunpack.c.l.b16 %v157
    %v472 = vunpack.c.l.b16 %v158
    %v473 = vunpack.c.l.b16 %v159
    %v474 = vunpack.c.l.b16 %v160
    %v475 = vunpack.c.l.b16 %v161
    %v476 = vunpack.c.l.b16 %v162
    %v477 = vunpack.c.l.b16 %v163
    %v478 = vunpack.c.l.b16 %v164
    %v479 = vunpack.c.l.b16 %v165
    %v480 = vunpack.c.l.b16 %v166
    %v481 = vunpack.c.l.b16 %v167
    %v482 = vunpack.c.l.b16 %v168
    %v483 = vunpack.c.l.b16 %v169
    %v484 = vunpack.c.l.b16 %v170
    %v485 = vunpack.c.l.b16 %v171
    %v486 = vunpack.c.l.b16 %v172
    %v487 = vunpack.c.l.b16 %v173
    %v488 = vunpack.c.l.b16 %v174
    %v489 = vunpack.c.l.b16 %v175
    %v490 = vunpack.c.l.b16 %v176
    %v491 = vunpack.c.l.b16 %v177
    %v492 = vunpack.c.l.b16 %v178
    %v493 = vunpack.c.l.b16 %v179
    %v494 = vunpack.c.l.b16 %v180
    %v495 = vunpack.c.l.b16 %v181
    %v496 = vunpack.c.l.b16 %v182
    %v497 = vunpack.c.l.b16 %v183
    %v498 = vunpack.c.l.b16 %v184
    %v499 = vunpack.c.l.b16 %v185
    %v500 = vunpack.c.l.b16 %v186
    %v501 = vunpack.c.l.b16 %v187
    %v502 = vunpack.c.l.b16 %v188
    %v503 = vunpack.c.l.b16 %v189
    %v504 = vunpack.c.l.b16 %v190
    %v505 = vunpack.c.l.b16 %v191
    %v506 = vunpack.c.l.b16 %v192
    %v507 = vunpack.c.l.b16 %v193
    %v508 = vunpack.c.l.b16 %v194
    %v509 = vunpack.c.l.b16 %v195
    %v510 = vunpack.c.l.b16 %v196
    %v511 = vunpack.c.l.b16 %v197
    %v512 = vunpack.c.l.b16 %v198
    %v513 = vunpack.c.l.b16 %v199
    %v514 = vunpack.c.l.b16 %v200
    %v515 = vunpack.c.l.b16 %v201
    %v516 = vunpack.c.l.b16 %v202
    %v517 = vunpack.c.l.b16 %v203
    %v518 = vunpack.c.l.b16 %v204
    %v519 = vunpack.c.l.b16 %v205
    %v520 = vunpack.c.l.b16 %v206
    %v521 = vunpack.c.l.b16 %v207
    %v522 = vunpack.c.l.b16 %v208
    %v523 = vunpack.c.l.b16 %v209
    %v524 = vunpack.c.l.b16 %v210
    %v525 = vunpack.c.l.b16 %v211
    %v526 = vunpack.c.l.b16 %v212
    %v527 = vunpack.c.l.b16 %v213
    %v528 = vunpack.c.l.b16 %v214
    %v529 = vunpack.c.l.b16 %v215
    %v530 = vunpack.c.l.b16 %v216
    %v531 = vunpack.c.l.b16 %v217
    %v532 = vunpack.c.l.b16 %v218
    %v533 = vunpack.c.l.b16 %v219
    %v534 = vunpack.c.l.b16 %v220
    %v535 = vunpack.c.l.b16 %v221
    %v536 = vunpack.c.l.b16 %v222
    %v537 = vunpack.c.l.b16 %v223
    %v538 = vunpack.c.l.b16 %v224
    %v539 = vunpack.c.l.b16 %v225
    %v540 = vunpack.c.l.b16 %v226
    %v541 = vunpack.c.l.b16 %v227
    %v542 = vunpack.c.l.b16 %v228
    %v543 = vunpack.c.l.b16 %v229
    %v544 = vunpack.c.l.b16 %v230
    %v545 = vunpack.c.l.b16 %v231
    %v546 = vunpack.c.l.b16 %v232
    %v547 = vunpack.c.l.b16 %v233
    %v548 = vunpack.c.l.b16 %v234
    %v549 = vpack.c.b16 %v422, %v421
    %v550 = vpack.c.b16 %v424, %v423
    %v551 = vpack.c.b16 %v426, %v425
    %v552 = vpack.c.b16 %v428, %v427
    %v553 = vpack.c.b16 %v430, %v429
    %v554 = vpack.c.b16 %v432, %v431
    %v555 = vpack.c.b16 %v434, %v433
    %v556 = vpack.c.b16 %v436, %v435
    %v557 = vpack.c.b16 %v438, %v437
    %v558 = vpack.c.b16 %v440, %v439
    %v559 = vpack.c.b16 %v442, %v441
    %v560 = vpack.c.b16 %v444, %v443
    %v561 = vpack.c.b16 %v446, %v445
    %v562 = vpack.c.b16 %v448, %v447
    %v563 = vpack.c.b16 %v450, %v449
    %v564 = vpack.c.b16 %v452, %v451
    %v565 = vpack.c.b16 %v454, %v453
    %v566 = vpack.c.b16 %v456, %v455
    %v567 = vpack.c.b16 %v458, %v457
    %v568 = vpack.c.b16 %v460, %v459
    %v569 = vpack.c.b16 %v462, %v461
    %v570 = vpack.c.b16 %v464, %v463
    %v571 = vpack.c.b16 %v466, %v465
    %v572 = vpack.c.b16 %v468, %v467
    %v573 = vpack.c.b16 %v470, %v469
    %v574 = vpack.c.b16 %v472, %v471
    %v575 = vpack.c.b16 %v474, %v473
    %v576 = vpack.c.b16 %v476, %v475
    %v577 = vpack.c.b16 %v478, %v477
    %v578 = vpack.c.b16 %v480, %v479
    %v579 = vpack.c.b16 %v482, %v481
    %v580 = vpack.c.b16 %v484, %v483
    %v581 = vpack.c.b16 %v486, %v485
    %v582 = vpack.c.b16 %v488, %v487
    %v583 = vpack.c.b16 %v490, %v489
    %v584 = vpack.c.b16 %v492, %v491
    %v585 = vpack.c.b16 %v494, %v493
    %v586 = vpack.c.b16 %v496, %v495
    %v587 = vpack.c.b16 %v498, %v497
    %v588 = vpack.c.b16 %v500, %v499
    %v589 = vpack.c.b16 %v502, %v501
    %v590 = vpack.c.b16 %v504, %v503
    %v591 = vpack.c.b16 %v506, %v505
    %v592 = vpack.c.b16 %v508, %v507
    %v593 = vpack.c.b16 %v510, %v509
    %v594 = vpack.c.b16 %v512, %v511
    %v595 = vpack.c.b16 %v514, %v513
    %v596 = vpack.c.b16 %v516, %v515
    %v597 = vpack.c.b16 %v518, %v517
    %v598 = vpack.c.b16 %v520, %v519
    %v599 = vpack.c.b16 %v522, %v521
    %v600 = vpack.c.b16 %v524, %v523
    %v601 = vpack.c.b16 %v526, %v525
    %v602 = vpack.c.b16 %v528, %v527
    %v603 = vpack.c.b16 %v530, %v529
    %v604 = vpack.c.b16 %v532, %v531
    %v605 = vpack.c.b16 %v534, %v533
    %v606 = vpack.c.b16 %v536, %v535
    %v607 = vpack.c.b16 %v538, %v537
    %v608 = vpack.c.b16 %v540, %v539
    %v609 = vpack.c.b16 %v542, %v541
    %v610 = vpack.c.b16 %v544, %v543
    %v611 = vpack.c.b16 %v546, %v545
    %v612 = vpack.c.b16 %v548, %v547
    %677 = vmatprep.subr.bf16.mxu0 0
    %678 = vmatpush1.bf16.msra.mxu0 %v549
    %679 = vmatprep.subr.bf16.mxu0 0
    %680 = vmatpush1.bf16.msra.mxu0 %v550
    %681 = vmatprep.subr.bf16.mxu0 0
    %682 = vmatpush1.bf16.msra.mxu0 %v551
    %683 = vmatprep.subr.bf16.mxu0 0
    %684 = vmatpush1.bf16.msra.mxu0 %v552
    %685 = vmatprep.subr.bf16.mxu0 0
    %686 = vmatpush1.bf16.msra.mxu0 %v553
    %687 = vmatprep.subr.bf16.mxu0 0
    %688 = vmatpush1.bf16.msra.mxu0 %v554
    %689 = vmatprep.subr.bf16.mxu0 0
    %690 = vmatpush1.bf16.msra.mxu0 %v555
    %691 = vmatprep.subr.bf16.mxu0 0
    %692 = vmatpush1.bf16.msra.mxu0 %v556
    %693 = vmatprep.subr.bf16.mxu0 0
    %694 = vmatpush1.bf16.msra.mxu0 %v557
    %695 = vmatprep.subr.bf16.mxu0 0
    %696 = vmatpush1.bf16.msra.mxu0 %v558
    %697 = vmatprep.subr.bf16.mxu0 0
    %698 = vmatpush1.bf16.msra.mxu0 %v559
    %699 = vmatprep.subr.bf16.mxu0 0
    %700 = vmatpush1.bf16.msra.mxu0 %v560
    %701 = vmatprep.subr.bf16.mxu0 0
    %702 = vmatpush1.bf16.msra.mxu0 %v561
    %703 = vmatprep.subr.bf16.mxu0 0
    %704 = vmatpush1.bf16.msra.mxu0 %v562
    %705 = vmatprep.subr.bf16.mxu0 0
    %706 = vmatpush1.bf16.msra.mxu0 %v563
    %707 = vmatprep.subr.bf16.mxu0 0
    %708 = vmatpush1.bf16.msra.mxu0 %v564
    %709 = vmatprep.mubr.bf16.mxu0 %v273
    %710 = vmatmul.mubr.bf16.gmra.mrb[0].mxu0 %v259
    %v711 = vpop.f32.mrb[0].mxu0
    %v712 = vadd.f32 0.0, %v711
    %v713 = vpop.f32.mrb[0].mxu0
    %v714 = vpop.f32.mrb[0].mxu0
    %v715 = vpop.f32.mrb[0].mxu0
    %716 = vdwg.mxu0
    %717 = vmatprep.subr.bf16.mxu0 0
    %718 = vmatpush1.bf16.msra.mxu0 %v565
    %719 = vmatprep.subr.bf16.mxu0 0
    %720 = vmatpush1.bf16.msra.mxu0 %v566
    %721 = vmatprep.subr.bf16.mxu0 0
    %722 = vmatpush1.bf16.msra.mxu0 %v567
    %723 = vmatprep.subr.bf16.mxu0 0
    %724 = vmatpush1.bf16.msra.mxu0 %v568
    %725 = vmatprep.subr.bf16.mxu0 0
    %726 = vmatpush1.bf16.msra.mxu0 %v569
    %727 = vmatprep.subr.bf16.mxu0 0
    %728 = vmatpush1.bf16.msra.mxu0 %v570
    %729 = vmatprep.subr.bf16.mxu0 0
    %730 = vmatpush1.bf16.msra.mxu0 %v571
    %731 = vmatprep.subr.bf16.mxu0 0
    %732 = vmatpush1.bf16.msra.mxu0 %v572
    %733 = vmatprep.subr.bf16.mxu0 0
    %734 = vmatpush1.bf16.msra.mxu0 %v573
    %735 = vmatprep.subr.bf16.mxu0 0
    %736 = vmatpush1.bf16.msra.mxu0 %v574
    %737 = vmatprep.subr.bf16.mxu0 0
    %738 = vmatpush1.bf16.msra.mxu0 %v575
    %739 = vmatprep.subr.bf16.mxu0 0
    %740 = vmatpush1.bf16.msra.mxu0 %v576
    %741 = vmatprep.subr.bf16.mxu0 0
    %742 = vmatpush1.bf16.msra.mxu0 %v577
    %743 = vmatprep.subr.bf16.mxu0 0
    %744 = vmatpush1.bf16.msra.mxu0 %v578
    %745 = vmatprep.subr.bf16.mxu0 0
    %746 = vmatpush1.bf16.msra.mxu0 %v579
    %747 = vmatprep.subr.bf16.mxu0 0
    %748 = vmatpush1.bf16.msra.mxu0 %v580
    %749 = vmatprep.mubr.bf16.mxu0 %v283
    %750 = vmatmul.mubr.bf16.gmra.mrb[0].mxu0 %v281
    %v751 = vpop.f32.mrb[0].mxu0
    %v752 = vadd.f32 %v712, %v751
    %v753 = vpop.f32.mrb[0].mxu0
    %v754 = vpop.f32.mrb[0].mxu0
    %v755 = vpop.f32.mrb[0].mxu0
    %756 = vdwg.mxu0
    %757 = vmatprep.subr.bf16.mxu0 0
    %758 = vmatpush1.bf16.msra.mxu0 %v581
    %759 = vmatprep.subr.bf16.mxu0 0
    %760 = vmatpush1.bf16.msra.mxu0 %v582
    %761 = vmatprep.subr.bf16.mxu0 0
    %762 = vmatpush1.bf16.msra.mxu0 %v583
    %763 = vmatprep.subr.bf16.mxu0 0
    %764 = vmatpush1.bf16.msra.mxu0 %v584
    %765 = vmatprep.subr.bf16.mxu0 0
    %766 = vmatpush1.bf16.msra.mxu0 %v585
    %767 = vmatprep.subr.bf16.mxu0 0
    %768 = vmatpush1.bf16.msra.mxu0 %v586
    %769 = vmatprep.subr.bf16.mxu0 0
    %770 = vmatpush1.bf16.msra.mxu0 %v587
    %771 = vmatprep.subr.bf16.mxu0 0
    %772 = vmatpush1.bf16.msra.mxu0 %v588
    %773 = vmatprep.subr.bf16.mxu0 0
    %774 = vmatpush1.bf16.msra.mxu0 %v589
    %775 = vmatprep.subr.bf16.mxu0 0
    %776 = vmatpush1.bf16.msra.mxu0 %v590
    %777 = vmatprep.subr.bf16.mxu0 0
    %778 = vmatpush1.bf16.msra.mxu0 %v591
    %779 = vmatprep.subr.bf16.mxu0 0
    %780 = vmatpush1.bf16.msra.mxu0 %v592
    %781 = vmatprep.subr.bf16.mxu0 0
    %782 = vmatpush1.bf16.msra.mxu0 %v593
    %783 = vmatprep.subr.bf16.mxu0 0
    %784 = vmatpush1.bf16.msra.mxu0 %v594
    %785 = vmatprep.subr.bf16.mxu0 0
    %786 = vmatpush1.bf16.msra.mxu0 %v595
    %787 = vmatprep.subr.bf16.mxu0 0
    %788 = vmatpush1.bf16.msra.mxu0 %v596
    %789 = vmatprep.mubr.bf16.mxu0 %v280
    %790 = vmatmul.mubr.bf16.gmra.mrb[0].mxu0 %v266
    %v791 = vpop.f32.mrb[0].mxu0
    %v792 = vadd.f32 %v752, %v791
    %v793 = vpop.f32.mrb[0].mxu0
    %v794 = vpop.f32.mrb[0].mxu0
    %v795 = vpop.f32.mrb[0].mxu0
    %796 = vdwg.mxu0
    %797 = vmatprep.subr.bf16.mxu0 0
    %798 = vmatpush1.bf16.msra.mxu0 %v597
    %799 = vmatprep.subr.bf16.mxu0 0
    %800 = vmatpush1.bf16.msra.mxu0 %v598
    %801 = vmatprep.subr.bf16.mxu0 0
    %802 = vmatpush1.bf16.msra.mxu0 %v599
    %803 = vmatprep.subr.bf16.mxu0 0
    %804 = vmatpush1.bf16.msra.mxu0 %v600
    %805 = vmatprep.subr.bf16.mxu0 0
    %806 = vmatpush1.bf16.msra.mxu0 %v601
    %807 = vmatprep.subr.bf16.mxu0 0
    %808 = vmatpush1.bf16.msra.mxu0 %v602
    %809 = vmatprep.subr.bf16.mxu0 0
    %810 = vmatpush1.bf16.msra.mxu0 %v603
    %811 = vmatprep.subr.bf16.mxu0 0
    %812 = vmatpush1.bf16.msra.mxu0 %v604
    %813 = vmatprep.subr.bf16.mxu0 0
    %814 = vmatpush1.bf16.msra.mxu0 %v605
    %815 = vmatprep.subr.bf16.mxu0 0
    %816 = vmatpush1.bf16.msra.mxu0 %v606
    %817 = vmatprep.subr.bf16.mxu0 0
    %818 = vmatpush1.bf16.msra.mxu0 %v607
    %819 = vmatprep.subr.bf16.mxu0 0
    %820 = vmatpush1.bf16.msra.mxu0 %v608
    %821 = vmatprep.subr.bf16.mxu0 0
    %822 = vmatpush1.bf16.msra.mxu0 %v609
    %823 = vmatprep.subr.bf16.mxu0 0
    %824 = vmatpush1.bf16.msra.mxu0 %v610
    %825 = vmatprep.subr.bf16.mxu0 0
    %826 = vmatpush1.bf16.msra.mxu0 %v611
    %827 = vmatprep.subr.bf16.mxu0 0
    %828 = vmatpush1.bf16.msra.mxu0 %v612
    %829 = vmatprep.mubr.bf16.mxu0 %v284
    %830 = vmatmul.mubr.bf16.gmra.mrb[0].mxu0 %v282
    %v831 = vpop.f32.mrb[0].mxu0
    %v832 = vadd.f32 %v792, %v831
    %v833 = vpop.f32.mrb[0].mxu0
    %v834 = vpop.f32.mrb[0].mxu0
    %v835 = vpop.f32.mrb[0].mxu0
    %836 = vdwg.mxu0
    %v837 = vadd.f32 %v105, %v832
    %838 = vst [vmem:[#allocation2] sm:$0x3] %v837
    // Predicated region
    $region62: #{tpu_custom_call.1} parent=1 // pred_check
      %p839 = pneg %p100
    $region63: #{tpu_custom_call.1} parent=1 // pred_check_branch
      %841 = sbr.rel (%p839) target = $region65
    $region64: #{tpu_custom_call.1} parent=1 // pred_region
      %v842 = vld [vmem:[#allocation2] sm:$0x3]
      %v843 = vld [vmem:[%s2] sm:$0x1]
      %v845 = vlaneseq
      %v846 = vshrl.u32 %v845, 7
      %v847 = vsub.s32 0, %v846
      %v848 = vrot.slane %v843, %v847
      %v850 = vadd.f32 %v842, %v848
      %v851 = vmax.f32 %v850, 0.0
      %v852 = vpack.c.bf16 %v851, %v851
      %v853 = vld [vmem:[#allocation8] sm:$0xf]
      %v854 = vld [vmem:[#allocation8 + $0x4] sm:$0xf]
      %v855 = vld [vmem:[#allocation8 + $0x8] sm:$0xf]
      %v856 = vld [vmem:[#allocation8 + $0xc] sm:$0xf]
      %v857 = vld [vmem:[#allocation8 + $0x10] sm:$0xf]
      %v858 = vld [vmem:[#allocation8 + $0x14] sm:$0xf]
      %v859 = vld [vmem:[#allocation8 + $0x18] sm:$0xf]
      %v860 = vld [vmem:[#allocation8 + $0x1c] sm:$0xf]
      %v861 = vld [vmem:[#allocation8 + $0x20] sm:$0xf]
      %v862 = vld [vmem:[#allocation8 + $0x24] sm:$0xf]
      %v863 = vld [vmem:[#allocation8 + $0x28] sm:$0xf]
      %v864 = vld [vmem:[#allocation8 + $0x2c] sm:$0xf]
      %v865 = vld [vmem:[#allocation8 + $0x30] sm:$0xf]
      %v866 = vld [vmem:[#allocation8 + $0x34] sm:$0xf]
      %v867 = vld [vmem:[#allocation8 + $0x38] sm:$0xf]
      %v868 = vld [vmem:[#allocation8 + $0x3c] sm:$0xf]
      %v869 = vld [vmem:[%s4] sm:$0x1]
      %v871 = vlaneseq
      %v872 = vshrl.u32 %v871, 7
      %v873 = vsub.s32 0, %v872
      %v874 = vrot.slane %v869, %v873
      %v892 = vunpack.c.l.b16 %v853
      %v893 = vunpack.c.l.b16 %v854
      %v894 = vunpack.c.l.b16 %v855
      %v895 = vunpack.c.l.b16 %v856
      %v896 = vunpack.c.l.b16 %v857
      %v897 = vunpack.c.l.b16 %v858
      %v898 = vunpack.c.l.b16 %v859
      %v899 = vunpack.c.l.b16 %v860
      %v900 = vunpack.c.l.b16 %v861
      %v901 = vunpack.c.l.b16 %v862
      %v902 = vunpack.c.l.b16 %v863
      %v903 = vunpack.c.l.b16 %v864
      %v904 = vunpack.c.l.b16 %v865
      %v905 = vunpack.c.l.b16 %v866
      %v906 = vunpack.c.l.b16 %v867
      %v907 = vunpack.c.l.b16 %v868
      %v908 = vpack.c.b16 %v893, %v892
      %v909 = vpack.c.b16 %v895, %v894
      %v910 = vpack.c.b16 %v897, %v896
      %v911 = vpack.c.b16 %v899, %v898
      %v912 = vpack.c.b16 %v901, %v900
      %v913 = vpack.c.b16 %v903, %v902
      %v914 = vpack.c.b16 %v905, %v904
      %v915 = vpack.c.b16 %v907, %v906
      %924 = vmatprep.subr.bf16.mxu0 0
      %925 = vmatpush1.bf16.msra.mxu0 %v908
      %926 = vmatprep.subr.bf16.mxu0 0
      %927 = vmatpush1.bf16.msra.mxu0 %v909
      %928 = vmatprep.subr.bf16.mxu0 0
      %929 = vmatpush1.bf16.msra.mxu0 %v910
      %930 = vmatprep.subr.bf16.mxu0 0
      %931 = vmatpush1.bf16.msra.mxu0 %v911
      %932 = vmatprep.subr.bf16.mxu0 0
      %933 = vmatpush1.bf16.msra.mxu0 %v912
      %934 = vmatprep.subr.bf16.mxu0 0
      %935 = vmatpush1.bf16.msra.mxu0 %v913
      %936 = vmatprep.subr.bf16.mxu0 0
      %937 = vmatpush1.bf16.msra.mxu0 %v914
      %938 = vmatprep.subr.bf16.mxu0 0
      %939 = vmatpush1.bf16.msra.mxu0 %v915
      %940 = vmatprep.subr.bf16.mxu0 0
      %941 = vmatpush1.bf16.msra.mxu0 0
      %942 = vmatprep.subr.bf16.mxu0 0
      %943 = vmatpush1.bf16.msra.mxu0 0
      %944 = vmatprep.subr.bf16.mxu0 0
      %945 = vmatpush1.bf16.msra.mxu0 0
      %946 = vmatprep.subr.bf16.mxu0 0
      %947 = vmatpush1.bf16.msra.mxu0 0
      %948 = vmatprep.subr.bf16.mxu0 0
      %949 = vmatpush1.bf16.msra.mxu0 0
      %950 = vmatprep.subr.bf16.mxu0 0
      %951 = vmatpush1.bf16.msra.mxu0 0
      %952 = vmatprep.subr.bf16.mxu0 0
      %953 = vmatpush1.bf16.msra.mxu0 0
      %954 = vmatprep.subr.bf16.mxu0 0
      %955 = vmatpush1.bf16.msra.mxu0 0
      %956 = vmatprep.mubr.bf16.mxu0 0
      %957 = vmatmul.mubr.bf16.gmra.mrb[0].mxu0 %v852
      %v958 = vpop.f32.mrb[0].mxu0
      %v959 = vadd.f32 %v874, %v958
      %v960 = vpop.f32.mrb[0].mxu0
      %v961 = vpop.f32.mrb[0].mxu0
      %v962 = vpop.f32.mrb[0].mxu0
      %963 = vdwg.mxu0
      %v964 = vmax.f32 %v959, 0.0
      %v965 = vpack.c.bf16 %v964, %v964
      %v966 = vld [vmem:[#allocation9] sm:$0xf]
      %v967 = vld [vmem:[#allocation9 + $0x4] sm:$0xf]
      %v968 = vld [vmem:[#allocation9 + $0x8] sm:$0xf]
      %v969 = vld [vmem:[#allocation9 + $0xc] sm:$0xf]
      %v970 = vld [vmem:[#allocation9 + $0x10] sm:$0xf]
      %v971 = vld [vmem:[#allocation9 + $0x14] sm:$0xf]
      %v972 = vld [vmem:[#allocation9 + $0x18] sm:$0xf]
      %v973 = vld [vmem:[#allocation9 + $0x1c] sm:$0xf]
      %v974 = vld [vmem:[#allocation9 + $0x20] sm:$0xf]
      %v975 = vld [vmem:[#allocation9 + $0x24] sm:$0xf]
      %v976 = vld [vmem:[#allocation9 + $0x28] sm:$0xf]
      %v977 = vld [vmem:[#allocation9 + $0x2c] sm:$0xf]
      %v978 = vld [vmem:[#allocation9 + $0x30] sm:$0xf]
      %v979 = vld [vmem:[#allocation9 + $0x34] sm:$0xf]
      %v980 = vld [vmem:[#allocation9 + $0x38] sm:$0xf]
      %v981 = vld [vmem:[#allocation9 + $0x3c] sm:$0xf]
      %v982 = vld [vmem:[%s6] sm:$0x1]
      %v984 = vlaneseq
      %v985 = vshrl.u32 %v984, 7
      %v986 = vsub.s32 0, %v985
      %v987 = vrot.slane %v982, %v986
      %v1005 = vunpack.c.l.b16 %v966
      %v1006 = vunpack.c.l.b16 %v967
      %v1007 = vunpack.c.l.b16 %v968
      %v1008 = vunpack.c.l.b16 %v969
      %v1009 = vunpack.c.l.b16 %v970
      %v1010 = vunpack.c.l.b16 %v971
      %v1011 = vunpack.c.l.b16 %v972
      %v1012 = vunpack.c.l.b16 %v973
      %v1013 = vunpack.c.l.b16 %v974
      %v1014 = vunpack.c.l.b16 %v975
      %v1015 = vunpack.c.l.b16 %v976
      %v1016 = vunpack.c.l.b16 %v977
      %v1017 = vunpack.c.l.b16 %v978
      %v1018 = vunpack.c.l.b16 %v979
      %v1019 = vunpack.c.l.b16 %v980
      %v1020 = vunpack.c.l.b16 %v981
      %v1021 = vpack.c.b16 %v1006, %v1005
      %v1022 = vpack.c.b16 %v1008, %v1007
      %v1023 = vpack.c.b16 %v1010, %v1009
      %v1024 = vpack.c.b16 %v1012, %v1011
      %v1025 = vpack.c.b16 %v1014, %v1013
      %v1026 = vpack.c.b16 %v1016, %v1015
      %v1027 = vpack.c.b16 %v1018, %v1017
      %v1028 = vpack.c.b16 %v1020, %v1019
      %1037 = vmatprep.subr.bf16.mxu0 0
      %1038 = vmatpush1.bf16.msra.mxu0 %v1021
      %1039 = vmatprep.subr.bf16.mxu0 0
      %1040 = vmatpush1.bf16.msra.mxu0 %v1022
      %1041 = vmatprep.subr.bf16.mxu0 0
      %1042 = vmatpush1.bf16.msra.mxu0 %v1023
      %1043 = vmatprep.subr.bf16.mxu0 0
      %1044 = vmatpush1.bf16.msra.mxu0 %v1024
      %1045 = vmatprep.subr.bf16.mxu0 0
      %1046 = vmatpush1.bf16.msra.mxu0 %v1025
      %1047 = vmatprep.subr.bf16.mxu0 0
      %1048 = vmatpush1.bf16.msra.mxu0 %v1026
      %1049 = vmatprep.subr.bf16.mxu0 0
      %1050 = vmatpush1.bf16.msra.mxu0 %v1027
      %1051 = vmatprep.subr.bf16.mxu0 0
      %1052 = vmatpush1.bf16.msra.mxu0 %v1028
      %1053 = vmatprep.subr.bf16.mxu0 0
      %1054 = vmatpush1.bf16.msra.mxu0 0
      %1055 = vmatprep.subr.bf16.mxu0 0
      %1056 = vmatpush1.bf16.msra.mxu0 0
      %1057 = vmatprep.subr.bf16.mxu0 0
      %1058 = vmatpush1.bf16.msra.mxu0 0
      %1059 = vmatprep.subr.bf16.mxu0 0
      %1060 = vmatpush1.bf16.msra.mxu0 0
      %1061 = vmatprep.subr.bf16.mxu0 0
      %1062 = vmatpush1.bf16.msra.mxu0 0
      %1063 = vmatprep.subr.bf16.mxu0 0
      %1064 = vmatpush1.bf16.msra.mxu0 0
      %1065 = vmatprep.subr.bf16.mxu0 0
      %1066 = vmatpush1.bf16.msra.mxu0 0
      %1067 = vmatprep.subr.bf16.mxu0 0
      %1068 = vmatpush1.bf16.msra.mxu0 0
      %1069 = vmatprep.mubr.bf16.mxu0 0
      %1070 = vmatmul.mubr.bf16.gmra.mrb[0].mxu0 %v965
      %v1071 = vpop.f32.mrb[0].mxu0
      %v1072 = vadd.f32 %v987, %v1071
      %v1073 = vpop.f32.mrb[0].mxu0
      %v1074 = vpop.f32.mrb[0].mxu0
      %v1075 = vpop.f32.mrb[0].mxu0
      %1076 = vdwg.mxu0
      %v1077 = vmax.f32 %v1072, 0.0
      %v1078 = vpack.c.bf16 %v1077, %v1077
      %v1079 = vld [vmem:[#allocation11] sm:$0xf]
      %v1080 = vld [vmem:[#allocation11 + $0x4] sm:$0xf]
      %v1081 = vld [vmem:[#allocation11 + $0x8] sm:$0xf]
      %v1082 = vld [vmem:[#allocation11 + $0xc] sm:$0xf]
      %v1083 = vld [vmem:[#allocation11 + $0x10] sm:$0xf]
      %v1084 = vld [vmem:[#allocation11 + $0x14] sm:$0xf]
      %v1085 = vld [vmem:[#allocation11 + $0x18] sm:$0xf]
      %v1086 = vld [vmem:[#allocation11 + $0x1c] sm:$0xf]
      %v1087 = vld [vmem:[#allocation11 + $0x20] sm:$0xf]
      %v1088 = vld [vmem:[#allocation11 + $0x24] sm:$0xf]
      %v1089 = vld [vmem:[#allocation11 + $0x28] sm:$0xf]
      %v1090 = vld [vmem:[#allocation11 + $0x2c] sm:$0xf]
      %v1091 = vld [vmem:[#allocation11 + $0x30] sm:$0xf]
      %v1092 = vld [vmem:[#allocation11 + $0x34] sm:$0xf]
      %v1093 = vld [vmem:[#allocation11 + $0x38] sm:$0xf]
      %v1094 = vld [vmem:[#allocation11 + $0x3c] sm:$0xf]
      %v1095 = vld [vmem:[%s8] sm:$0x1]
      %v1097 = vlaneseq
      %v1098 = vshrl.u32 %v1097, 7
      %v1099 = vsub.s32 0, %v1098
      %v1100 = vrot.slane %v1095, %v1099
      %v1118 = vunpack.c.l.b16 %v1079
      %v1119 = vunpack.c.l.b16 %v1080
      %v1120 = vunpack.c.l.b16 %v1081
      %v1121 = vunpack.c.l.b16 %v1082
      %v1122 = vunpack.c.l.b16 %v1083
      %v1123 = vunpack.c.l.b16 %v1084
      %v1124 = vunpack.c.l.b16 %v1085
      %v1125 = vunpack.c.l.b16 %v1086
      %v1126 = vunpack.c.l.b16 %v1087
      %v1127 = vunpack.c.l.b16 %v1088
      %v1128 = vunpack.c.l.b16 %v1089
      %v1129 = vunpack.c.l.b16 %v1090
      %v1130 = vunpack.c.l.b16 %v1091
      %v1131 = vunpack.c.l.b16 %v1092
      %v1132 = vunpack.c.l.b16 %v1093
      %v1133 = vunpack.c.l.b16 %v1094
      %v1134 = vpack.c.b16 %v1119, %v1118
      %v1135 = vpack.c.b16 %v1121, %v1120
      %v1136 = vpack.c.b16 %v1123, %v1122
      %v1137 = vpack.c.b16 %v1125, %v1124
      %v1138 = vpack.c.b16 %v1127, %v1126
      %v1139 = vpack.c.b16 %v1129, %v1128
      %v1140 = vpack.c.b16 %v1131, %v1130
      %v1141 = vpack.c.b16 %v1133, %v1132
      %1150 = vmatprep.subr.bf16.mxu0 0
      %1151 = vmatpush1.bf16.msra.mxu0 %v1134
      %1152 = vmatprep.subr.bf16.mxu0 0
      %1153 = vmatpush1.bf16.msra.mxu0 %v1135
      %1154 = vmatprep.subr.bf16.mxu0 0
      %1155 = vmatpush1.bf16.msra.mxu0 %v1136
      %1156 = vmatprep.subr.bf16.mxu0 0
      %1157 = vmatpush1.bf16.msra.mxu0 %v1137
      %1158 = vmatprep.subr.bf16.mxu0 0
      %1159 = vmatpush1.bf16.msra.mxu0 %v1138
      %1160 = vmatprep.subr.bf16.mxu0 0
      %1161 = vmatpush1.bf16.msra.mxu0 %v1139
      %1162 = vmatprep.subr.bf16.mxu0 0
      %1163 = vmatpush1.bf16.msra.mxu0 %v1140
      %1164 = vmatprep.subr.bf16.mxu0 0
      %1165 = vmatpush1.bf16.msra.mxu0 %v1141
      %1166 = vmatprep.subr.bf16.mxu0 0
      %1167 = vmatpush1.bf16.msra.mxu0 0
      %1168 = vmatprep.subr.bf16.mxu0 0
      %1169 = vmatpush1.bf16.msra.mxu0 0
      %1170 = vmatprep.subr.bf16.mxu0 0
      %1171 = vmatpush1.bf16.msra.mxu0 0
      %1172 = vmatprep.subr.bf16.mxu0 0
      %1173 = vmatpush1.bf16.msra.mxu0 0
      %1174 = vmatprep.subr.bf16.mxu0 0
      %1175 = vmatpush1.bf16.msra.mxu0 0
      %1176 = vmatprep.subr.bf16.mxu0 0
      %1177 = vmatpush1.bf16.msra.mxu0 0
      %1178 = vmatprep.subr.bf16.mxu0 0
      %1179 = vmatpush1.bf16.msra.mxu0 0
      %1180 = vmatprep.subr.bf16.mxu0 0
      %1181 = vmatpush1.bf16.msra.mxu0 0
      %1182 = vmatprep.mubr.bf16.mxu0 0
      %1183 = vmatmul.mubr.bf16.gmra.mrb[0].mxu0 %v1078
      %v1184 = vpop.f32.mrb[0].mxu0
      %v1185 = vadd.f32 %v1100, %v1184
      %v1186 = vpop.f32.mrb[0].mxu0
      %v1187 = vpop.f32.mrb[0].mxu0
      %v1188 = vpop.f32.mrb[0].mxu0
      %1189 = vdwg.mxu0
      %v1190 = vxor.u32 %v1185, 2147483648
      %v1191 = vmul.f32 %v1190, 1.442695
      %v1192 = vpow.pop %v1191
      %v1193 = vadd.f32 %v1192, 1.0
      %v1194 = vrcp.pop %v1193
      %v1195 = vmul.f32 1.0, %v1194
      %1196 = vst [vmem:[#allocation12] sm:$0x3] %v1195
    $region65: #{tpu_custom_call.1} parent=1 // pred_fallthru
      _
    // Predicated region
    $region66: #{tpu_custom_call.1} parent=1 // pred_check
      _
    $region67: #{tpu_custom_call.1} parent=1 // pred_check_branch
      %1198 = sbr.rel (0) target = $region69
    $region68: #{tpu_custom_call.1} parent=1 // pred_region
      %s1200 = ssub.s32 32, 32
      %1201 = vsyncadd [#allocation5], %s1200
      %s1203 = sshll.u32 [#allocation12], 4
      %s1204 = int_to_ptr.vmem [resolvable:$true] %s1203
      %1206 = dma.vmem_to_hbm [thread:$0]  %s1204, 32, %s9, [#allocation5]
    $region69: #{tpu_custom_call.1} parent=1 // pred_fallthru
      _
    // Predicated region
    $region70: #{tpu_custom_call.1} parent=1 // pred_check
      _
    $region71: #{tpu_custom_call.1} parent=1 // pred_check_branch
      %1208 = sbr.rel (0) target = $region73
    $region72: #{tpu_custom_call.1} parent=1 // pred_region
      %1209 = dma.done [#allocation5], 32
    $region73: #{tpu_custom_call.1} parent=1 // pred_fallthru
      _
    %1210 = vsyncpa [#allocation4], 1
    %1211 = vsyncpa [#allocation7], 1
    %1212 = vsyncpa [#allocation10], 1
    %1213 = vsyncpa [#allocation5], 1

</llo_original>
